<compile_context>
chip_gen: v5e
topology: v5e:2x2
jax: 0.10.0
libtpu: 0.0.40
codegen_flags: <defaults>
</compile_context>

<pallas_src>
import functools

import jax
import jax.numpy as jnp
from jax.experimental import pallas as pl
from jax.experimental.pallas import tpu as pltpu
import numpy as np

LANE = 128


def _round_up(x: int, m: int) -> int:
    return ((x + m - 1) // m) * m


# ------------------------------------------------------------------
# Deterministic "parameter" construction (window, DFT basis, mel fb)
# ------------------------------------------------------------------
def hann_window(n_fft: int) -> np.ndarray:
    # periodic hann window (torch.hann_window default, periodic=True)
    n = np.arange(n_fft, dtype=np.float64)
    return (0.5 * (1.0 - np.cos(2.0 * np.pi * n / n_fft))).astype(np.float32)


def windowed_dft_matrices(n_fft: int) -> tuple[np.ndarray, np.ndarray]:
    """Real/imag one-sided DFT matrices with the hann window folded in."""
    n_freqs = n_fft // 2 + 1
    n = np.arange(n_fft, dtype=np.float64)[:, None]      # (n_fft, 1)
    k = np.arange(n_freqs, dtype=np.float64)[None, :]    # (1, n_freqs)
    ang = 2.0 * np.pi * n * k / n_fft
    win = hann_window(n_fft).astype(np.float64)[:, None]
    wr = (win * np.cos(ang)).astype(np.float32)
    wi = (-win * np.sin(ang)).astype(np.float32)
    return wr, wi


def melscale_fbanks(n_freqs: int, n_mels: int, sample_rate: int,
                    f_min: float = 0.0, f_max: float | None = None) -> np.ndarray:
    """torchaudio.functional.melscale_fbanks (htk scale, norm=None)."""
    if f_max is None:
        f_max = sample_rate / 2.0

    def hz_to_mel(f):
        return 2595.0 * np.log10(1.0 + f / 700.0)

    def mel_to_hz(m):
        return 700.0 * (10.0 ** (m / 2595.0) - 1.0)

    all_freqs = np.linspace(0.0, sample_rate / 2.0, n_freqs)
    m_min, m_max = hz_to_mel(f_min), hz_to_mel(f_max)
    m_pts = np.linspace(m_min, m_max, n_mels + 2)
    f_pts = mel_to_hz(m_pts)
    f_diff = f_pts[1:] - f_pts[:-1]                        # (n_mels + 1,)
    slopes = f_pts[None, :] - all_freqs[:, None]           # (n_freqs, n_mels + 2)
    down = -slopes[:, :-2] / f_diff[:-1]
    up = slopes[:, 2:] / f_diff[1:]
    fb = np.maximum(0.0, np.minimum(down, up))
    return fb.astype(np.float32)                           # (n_freqs, n_mels)


def build_padded_weights(n_fft: int, n_mels: int, sample_rate: int,
                         n_freqs_pad: int, n_mels_pad: int):
    """[Wr | Wi] with freq lanes padded to n_freqs_pad; fb padded to (P, M)."""
    n_freqs = n_fft // 2 + 1
    wr, wi = windowed_dft_matrices(n_fft)
    fb = melscale_fbanks(n_freqs, n_mels, sample_rate)
    w = np.zeros((n_fft, 2 * n_freqs_pad), np.float32)
    w[:, :n_freqs] = wr
    w[:, n_freqs_pad:n_freqs_pad + n_freqs] = wi
    fb_p = np.zeros((n_freqs_pad, n_mels_pad), np.float32)
    fb_p[:n_freqs, :n_mels] = fb
    return w, fb_p


# ------------------------------------------------------------------
# Pallas kernel: fused framing + windowed DFT power + mel projection
# ------------------------------------------------------------------
def mel_spectrogram_kernel(x2_ref, w_ref, fb_ref, out_ref, *, hop, r, tile_t):
    # x2_ref : (rows_pad, hop)  reflect-padded audio of one batch element,
    #                           reshaped into hop-sized rows (resident in VMEM)
    # w_ref  : (n_fft, 2*P)     [Wr | Wi], frequency lanes padded to P = 128k
    # fb_ref : (P, M)           mel filterbank, zero-padded, lane-dense
    # out_ref: (tile_t, M)      mel power for tile_t frames
    t0 = pl.multiple_of(pl.program_id(1) * tile_t, tile_t)
    w = w_ref[...]                                           # (n_fft, 2P)

    # Frame t = xp[t*hop : t*hop + n_fft] == concat_i x2[t + i]  (0 <= i < r)
    #   => [re | im](t0:t0+tile_t) = sum_i x2[t0+i : t0+i+tile_t] @ W[i*hop:(i+1)*hop]
    ri = jnp.dot(x2_ref[pl.ds(t0, tile_t), :], w[:hop, :],
                 preferred_element_type=jnp.float32)
    for i in range(1, r):                                    # r is tiny (typ. 2)
        ri = ri + jnp.dot(x2_ref[pl.ds(t0 + i, tile_t), :],
                          w[i * hop:(i + 1) * hop, :],
                          preferred_element_type=jnp.float32)

    p = fb_ref.shape[0]
    re = ri[:, :p]
    im = ri[:, p:]
    power = re * re + im * im                                # (tile_t, P)
    out_ref[...] = jnp.dot(power, fb_ref[...],
                           preferred_element_type=jnp.float32)


@functools.partial(jax.jit, static_argnames=("n_fft", "hop_length", "n_mels",
                                             "sample_rate"))
def processing_layer_forward(x: jnp.ndarray, *, n_fft: int, hop_length: int,
                             n_mels: int, sample_rate: int) -> jnp.ndarray:
    """ProcessingLayer.forward (audio_feature='spectrogram').

    x: (batch, num_samples) float32 -> (batch, n_mels, n_frames) float32
    """
    assert n_fft % hop_length == 0, (
        "in-kernel framing requires hop_length | n_fft "
        "(torchaudio default hop = n_fft // 2 satisfies this)")
    # TODO(synk): general hop_length not dividing n_fft would need gcd-strided
    # row slices (or a precomputed-frames fallback path).

    B, S = x.shape
    r = n_fft // hop_length
    n_freqs = n_fft // 2 + 1
    P = _round_up(n_freqs, LANE)          # padded frequency lanes
    M = _round_up(n_mels, LANE)           # padded mel lanes (lane-dense stores)

    w_np, fb_np = build_padded_weights(n_fft, n_mels, sample_rate, P, M)
    w, fb = jnp.asarray(w_np), jnp.asarray(fb_np)

    # --- glue: reflect pad + reshape to hop-sized rows (no framed-tensor blowup)
    pad = n_fft // 2
    xp = jnp.pad(x.astype(jnp.float32), ((0, 0), (pad, pad)), mode="reflect")
    T = 1 + (xp.shape[1] - n_fft) // hop_length              # true frame count
    tile_t = min(256, _round_up(T, 8))                       # multiple of 8
    T_pad = _round_up(T, tile_t)
    rows = T + r - 1                                         # rows of real data
    x2 = xp[:, :rows * hop_length].reshape(B, rows, hop_length)
    rows_pad = T_pad + r - 1
    x2 = jnp.pad(x2, ((0, 0), (0, rows_pad - rows), (0, 0)))  # zero tail rows

    kernel = functools.partial(mel_spectrogram_kernel,
                               hop=hop_length, r=r, tile_t=tile_t)

    out = pl.pallas_call(
        kernel,
        out_shape=jax.ShapeDtypeStruct((B, T_pad, M), jnp.float32),
        grid_spec=pltpu.PrefetchScalarGridSpec(
            num_scalar_prefetch=0,
            grid=(B, T_pad // tile_t),
            in_specs=[
                # per-batch audio rows, resident across the T tiles
                pl.BlockSpec((pl.Squeezed(), rows_pad, hop_length),
                             lambda b, t: (b, 0, 0)),
                # constant weights (kept resident by Pallas)
                pl.BlockSpec((n_fft, 2 * P), lambda b, t: (0, 0)),
                pl.BlockSpec((P, M), lambda b, t: (0, 0)),
            ],
            out_specs=pl.BlockSpec((pl.Squeezed(), tile_t, M),
                                   lambda b, t: (b, t, 0)),
        ),
        compiler_params=pltpu.CompilerParams(
            dimension_semantics=("parallel", "parallel"),
            vmem_limit_bytes=32 * 1024 * 1024),
    )(x2, w, fb)

    # slice off T / mel padding; torchaudio layout is (batch, n_mels, time)
    return jnp.transpose(out[:, :T, :n_mels], (0, 2, 1))


# ------------------------------------------------------------------
# Pure-JAX reference (gather-based framing) for correctness checking.
# ------------------------------------------------------------------
def reference_forward(x, *, n_fft, hop_length, n_mels, sample_rate):
    n_freqs = n_fft // 2 + 1
    wr, wi = windowed_dft_matrices(n_fft)
    fb = melscale_fbanks(n_freqs, n_mels, sample_rate)
    pad = n_fft // 2
    xp = jnp.pad(x.astype(jnp.float32), ((0, 0), (pad, pad)), mode="reflect")
    T = 1 + (xp.shape[1] - n_fft) // hop_length
    starts = jnp.arange(T) * hop_length
    idx = starts[:, None] + jnp.arange(n_fft)[None, :]
    frames = xp[:, idx]                                       # (B, T, n_fft)
    re = jnp.einsum("btn,nf->btf", frames, jnp.asarray(wr))
    im = jnp.einsum("btn,nf->btf", frames, jnp.asarray(wi))
    power = re * re + im * im
    mel = jnp.einsum("btf,fm->btm", power, jnp.asarray(fb))
    return jnp.transpose(mel, (0, 2, 1))


if __name__ == "__main__":
    # Small, deterministic example: batch=2, 512 audio samples.
    batch, num_samples = 2, 512
    n_fft, hop_length, n_mels, sample_rate = 128, 64, 32, 8000

    key = jax.random.PRNGKey(0)
    x = jax.random.normal(key, (batch, num_samples), dtype=jnp.float32)

    y = processing_layer_forward(x, n_fft=n_fft, hop_length=hop_length,
                                 n_mels=n_mels, sample_rate=sample_rate)
    y = jax.block_until_ready(y)

    y_ref = reference_forward(x, n_fft=n_fft, hop_length=hop_length,
                              n_mels=n_mels, sample_rate=sample_rate)
    assert y.shape == (batch, n_mels, 1 + num_samples // hop_length), y.shape
    assert jnp.allclose(y, y_ref, rtol=1e-4, atol=1e-3), "mismatch vs reference"

    print("KERNEL_OK")
</pallas_src>

<mosaic_0001>
module attributes {stable_mosaic.version = 11 : i64} {
  func.func @mel_spectrogram_kernel(%arg0: i32, %arg1: i32, %arg2: memref<1x17x64xf32, #tpu.memory_space<vmem>>, %arg3: memref<128x256xf32, #tpu.memory_space<vmem>>, %arg4: memref<128x128xf32, #tpu.memory_space<vmem>>, %arg5: memref<1x16x128xf32, #tpu.memory_space<vmem>>) attributes {dimension_semantics = [#tpu.dimension_semantics<parallel>, #tpu.dimension_semantics<parallel>], iteration_bounds = array<i64: 2, 1>, scalar_prefetch = 0 : i64, scratch_operands = 0 : i64, tpu.core_type = #tpu.core_type<tc>, window_params = [{transform_indices = @transform_0, window_bounds = array<i64: 1, 17, 64>}, {pipeline_mode = #tpu.pipeline_mode<synchronous>, transform_indices = @transform_1, window_bounds = array<i64: 128, 256>}, {pipeline_mode = #tpu.pipeline_mode<synchronous>, transform_indices = @transform_2, window_bounds = array<i64: 128, 128>}, {transform_indices = @transform_3, window_bounds = array<i64: 1, 16, 128>}]} {
    %c16_i32 = arith.constant 16 : i32
    %0 = arith.muli %arg1, %c16_i32 : i32
    %1 = tpu.assume_multiple %0, 16 : i32
    %c0 = arith.constant 0 : index
    %c0_0 = arith.constant 0 : index
    %2 = vector.load %arg3[%c0, %c0_0] : memref<128x256xf32, #tpu.memory_space<vmem>>, vector<128x256xf32>
    %c0_1 = arith.constant 0 : index
    %3 = arith.index_cast %1 : i32 to index
    %c0_2 = arith.constant 0 : index
    %4 = vector.load %arg2[%c0_1, %3, %c0_2] : memref<1x17x64xf32, #tpu.memory_space<vmem>>, vector<1x16x64xf32>
    %5 = vector.shape_cast %4 : vector<1x16x64xf32> to vector<16x64xf32>
    %6 = vector.extract_strided_slice %2 {offsets = [0, 0], sizes = [64, 256], strides = [1, 1]} : vector<128x256xf32> to vector<64x256xf32>
    %cst = arith.constant dense<0.000000e+00> : vector<16x256xf32>
    %7 = tpu.matmul %5, %6, %cst {dimension_numbers = #tpu.dot_dimension_numbers<[1], [0], [0], [1], [0, 0, 1, 1], [], []>} : vector<16x64xf32>, vector<64x256xf32>, vector<16x256xf32> -> vector<16x256xf32>
    %c1_i32 = arith.constant 1 : i32
    %8 = arith.addi %1, %c1_i32 : i32
    %c0_3 = arith.constant 0 : index
    %9 = arith.index_cast %8 : i32 to index
    %c0_4 = arith.constant 0 : index
    %10 = vector.load %arg2[%c0_3, %9, %c0_4] : memref<1x17x64xf32, #tpu.memory_space<vmem>>, vector<1x16x64xf32>
    %11 = vector.shape_cast %10 : vector<1x16x64xf32> to vector<16x64xf32>
    %12 = vector.extract_strided_slice %2 {offsets = [64, 0], sizes = [64, 256], strides = [1, 1]} : vector<128x256xf32> to vector<64x256xf32>
    %cst_5 = arith.constant dense<0.000000e+00> : vector<16x256xf32>
    %13 = tpu.matmul %11, %12, %cst_5 {dimension_numbers = #tpu.dot_dimension_numbers<[1], [0], [0], [1], [0, 0, 1, 1], [], []>} : vector<16x64xf32>, vector<64x256xf32>, vector<16x256xf32> -> vector<16x256xf32>
    %14 = arith.addf %7, %13 : vector<16x256xf32>
    %15 = vector.extract_strided_slice %14 {offsets = [0, 0], sizes = [16, 128], strides = [1, 1]} : vector<16x256xf32> to vector<16x128xf32>
    %16 = vector.extract_strided_slice %14 {offsets = [0, 128], sizes = [16, 128], strides = [1, 1]} : vector<16x256xf32> to vector<16x128xf32>
    %17 = arith.mulf %15, %15 : vector<16x128xf32>
    %18 = arith.mulf %16, %16 : vector<16x128xf32>
    %19 = arith.addf %17, %18 : vector<16x128xf32>
    %c0_6 = arith.constant 0 : index
    %c0_7 = arith.constant 0 : index
    %20 = vector.load %arg4[%c0_6, %c0_7] : memref<128x128xf32, #tpu.memory_space<vmem>>, vector<128x128xf32>
    %cst_8 = arith.constant dense<0.000000e+00> : vector<16x128xf32>
    %21 = tpu.matmul %19, %20, %cst_8 {dimension_numbers = #tpu.dot_dimension_numbers<[1], [0], [0], [1], [0, 0, 1, 1], [], []>} : vector<16x128xf32>, vector<128x128xf32>, vector<16x128xf32> -> vector<16x128xf32>
    %c0_9 = arith.constant 0 : index
    %c0_10 = arith.constant 0 : index
    %c0_11 = arith.constant 0 : index
    %22 = vector.load %arg5[%c0_9, %c0_10, %c0_11] : memref<1x16x128xf32, #tpu.memory_space<vmem>>, vector<1x16x128xf32>
    %23 = vector.shape_cast %22 : vector<1x16x128xf32> to vector<16x128xf32>
    %24 = vector.shape_cast %21 : vector<16x128xf32> to vector<1x16x128xf32>
    tpu.vector_store %arg5[%c0_9, %c0_10, %c0_11], %24 {strides = array<i32>} : memref<1x16x128xf32, #tpu.memory_space<vmem>>, vector<1x16x128xf32>,
    return
  }
  func.func @transform_0(%arg0: i32, %arg1: i32) -> (i32, i32, i32) {
    %c0_i32 = arith.constant 0 : i32
    %c0_i32_0 = arith.constant 0 : i32
    %c0_i32_1 = arith.constant 0 : i32
    return %arg0, %c0_i32, %c0_i32_0 : i32, i32, i32
  }
  func.func @transform_1(%arg0: i32, %arg1: i32) -> (i32, i32) {
    %c0_i32 = arith.constant 0 : i32
    %c0_i32_0 = arith.constant 0 : i32
    %c0_i32_1 = arith.constant 0 : i32
    return %c0_i32, %c0_i32_0 : i32, i32
  }
  func.func @transform_2(%arg0: i32, %arg1: i32) -> (i32, i32) {
    %c0_i32 = arith.constant 0 : i32
    %c0_i32_0 = arith.constant 0 : i32
    %c0_i32_1 = arith.constant 0 : i32
    return %c0_i32, %c0_i32_0 : i32, i32
  }
  func.func @transform_3(%arg0: i32, %arg1: i32) -> (i32, i32, i32) {
    %c0_i32 = arith.constant 0 : i32
    %c0_i32_0 = arith.constant 0 : i32
    return %arg0, %arg1, %c0_i32 : i32, i32, i32
  }
}

</mosaic_0001>

<llo_original>
// kernel: processing_layer_forward.1
$region0: #{processing_layer_forward.1}
  #allocation0 [shape = 'u32[]', space=smem, size = 0x4, offset = 0x4, fixed_abs, tag = 'smem constant byte address 0x4 - core index']
  #allocation1 [shape = 'u32[72,128]{1,0:T(1,128)}', space=vmem, size = 0x9000, scoped, tag = 'internal scratch']
  %s0 = inlined_call_operand.vmem [shape: f32[2,17,64], index: 0, kind: input, shape index: {}]
  %s1 = inlined_call_operand.hbm [shape: f32[128,256], index: 1, kind: input, shape index: {}]
  %s2 = inlined_call_operand.vmem [shape: f32[128,128], index: 2, kind: input, shape index: {}]
  %s3 = inlined_call_operand.vmem [shape: f32[2,16,128], index: 3, kind: output, shape index: {}]
  %s4 = sld [smem:[#allocation0]]
  $region49: #{processing_layer_forward.1} parent=0
    _
  %s6 = ssub.s32 1, %s4
  %s7 = scalar_select 0, %s6, %s4
  $region1: #{processing_layer_forward.1} parent=0
    #allocation2 [shape = 'u8[131072]{0}', space=vmem, size = 0x20000, scoped, tag = 'input window, operand 1, single buffered']
    #allocation3 [shape = 's32[2]{0}', space=sflag, size = 0x8, scoped, tag = 'scoped memory for processing_layer_forward.1']
    %8 = vsyncpa [#allocation3], 0
    loop: start=0, step=1, limit=4
    $region2: #{processing_layer_forward.1} parent=1 // loop_pre_header
      _
    $region3: #{processing_layer_forward.1} parent=1 // loop_header
      %s10 = sphi 0, %s14
      %p11 = scmp.ge.s32.totalorder %s10, 4
      %s17 = sphi 0, %s29
      %s18 = sphi 0, %s25
      %s19 = sphi 0, %s17
      %s20 = sphi 0, %s18
      %s21 = sphi 0, %s19
      %s22 = sphi 0, %s20
      %s32 = sphi 0, %s34
      %s35 = sphi 0, %s32
      %s36 = sphi 0, %s35
      %s52 = sphi 0, %s36
      %s56 = sphi 0, %s56
      %s58 = sphi 0, %s56
      %s59 = sphi 0, %s58
      %s73 = sphi 0, %s59
      %s77 = sphi 0, %s77
      %s79 = sphi 0, %s77
      %s80 = sphi 0, %s79
      %s94 = sphi 0, %s80
      %s102 = sphi 0, %s104
      %s105 = sphi 0, %s102
      %s106 = sphi 0, %s105
      %s122 = sphi 0, %s106
    $region4: #{processing_layer_forward.1} parent=1 // loop_header_branch
      %13 = sbr.rel (%p11) target = $region8
    $region5: #{processing_layer_forward.1} parent=1 // loop_body
      %s15 = ssub.s32 %s10, 1
      %s16 = ssub.s32 %s10, 2
      %s23 = sadd.s32 1, %s18
      %p24 = scmp.ge.s32.totalorder %s23, 1
      %s25 = scalar_select %p24, 0, %s23
      %s26 = sadd.s32 1, %s17
      %s27 = scalar_select %p24, %s26, %s17
      %p28 = scmp.ge.s32.totalorder %s27, 2
      %s29 = scalar_select %p28, 0, %s27
      %s30 = ssub.s32 %s17, %s29
      %p31 = scmp.eq.s32.totalorder %s30, 0
      %s33 = sadd.s32 %s32, 1
      %s34 = scalar_select %p31, %s32, %s33
      %p37 = pneg %p31
      %p38 = scmp.eq.s32.totalorder %s10, 1
      %p39 = por %p37, %p38
      %p40 = scmp.ne.s32.totalorder %s32, %s35
      %p41 = scmp.eq.s32.totalorder %s10, 0
      %p42 = por %p40, %p41
      %p43 = scmp.ne.s32.totalorder %s32, %s35
      %p44 = scmp.eq.s32.totalorder %s15, 1
      %p45 = por %p43, %p44
      %p46 = scmp.ne.s32.totalorder %s35, %s36
      %p47 = scmp.eq.s32.totalorder %s15, 0
      %p48 = por %p46, %p47
      %p49 = scmp.ne.s32.totalorder %s35, %s36
      %p50 = scmp.eq.s32.totalorder %s16, 1
      %p51 = por %p49, %p50
      %p53 = scmp.ne.s32.totalorder %s36, %s52
      %p54 = scmp.eq.s32.totalorder %s16, 0
      %p55 = por %p53, %p54
      %s57 = sadd.s32 %s56, 1
      %p60 = scmp.eq.s32.totalorder %s10, 1
      %p61 = scmp.ne.s32.totalorder %s56, %s58
      %p62 = scmp.eq.s32.totalorder %s10, 0
      %p63 = por %p61, %p62
      %p64 = scmp.ne.s32.totalorder %s56, %s58
      %p65 = scmp.eq.s32.totalorder %s15, 1
      %p66 = por %p64, %p65
      %p67 = scmp.ne.s32.totalorder %s58, %s59
      %p68 = scmp.eq.s32.totalorder %s15, 0
      %p69 = por %p67, %p68
      %p70 = scmp.ne.s32.totalorder %s58, %s59
      %p71 = scmp.eq.s32.totalorder %s16, 1
      %p72 = por %p70, %p71
      %p74 = scmp.ne.s32.totalorder %s59, %s73
      %p75 = scmp.eq.s32.totalorder %s16, 0
      %p76 = por %p74, %p75
      %s78 = sadd.s32 %s77, 1
      %p81 = scmp.eq.s32.totalorder %s10, 1
      %p82 = scmp.ne.s32.totalorder %s77, %s79
      %p83 = scmp.eq.s32.totalorder %s10, 0
      %p84 = por %p82, %p83
      %p85 = scmp.ne.s32.totalorder %s77, %s79
      %p86 = scmp.eq.s32.totalorder %s15, 1
      %p87 = por %p85, %p86
      %p88 = scmp.ne.s32.totalorder %s79, %s80
      %p89 = scmp.eq.s32.totalorder %s15, 0
      %p90 = por %p88, %p89
      %p91 = scmp.ne.s32.totalorder %s79, %s80
      %p92 = scmp.eq.s32.totalorder %s16, 1
      %p93 = por %p91, %p92
      %p95 = scmp.ne.s32.totalorder %s80, %s94
      %p96 = scmp.eq.s32.totalorder %s16, 0
      %p97 = por %p95, %p96
      %s98 = ssub.s32 %s17, %s29
      %s99 = ssub.s32 %s18, %s25
      %s100 = sor.u32 %s98, %s99
      %p101 = scmp.eq.s32.totalorder %s100, 0
      %s103 = sadd.s32 %s102, 1
      %s104 = scalar_select %p101, %s102, %s103
      %p107 = pneg %p101
      %p108 = scmp.eq.s32.totalorder %s10, 1
      %p109 = por %p107, %p108
      %p110 = scmp.ne.s32.totalorder %s102, %s105
      %p111 = scmp.eq.s32.totalorder %s10, 0
      %p112 = por %p110, %p111
      %p113 = scmp.ne.s32.totalorder %s102, %s105
      %p114 = scmp.eq.s32.totalorder %s15, 1
      %p115 = por %p113, %p114
      %p116 = scmp.ne.s32.totalorder %s105, %s106
      %p117 = scmp.eq.s32.totalorder %s15, 0
      %p118 = por %p116, %p117
      %p119 = scmp.ne.s32.totalorder %s105, %s106
      %p120 = scmp.eq.s32.totalorder %s16, 1
      %p121 = por %p119, %p120
      %p123 = scmp.ne.s32.totalorder %s106, %s122
      %p124 = scmp.eq.s32.totalorder %s16, 0
      %p125 = por %p123, %p124
      %p126 = scmp.le.s32.totalorder 1, %s10
      %p127 = scmp.lt.s32.totalorder %s10, 3
      %p128 = pnand %p126, %p127
      %p129 = pneg %p128
      // Predicated region
      $region9: #{processing_layer_forward.1} parent=5 // pred_check
        _
      $region10: #{processing_layer_forward.1} parent=5 // pred_check_branch
        %131 = sbr.rel (%p128) target = $region12
      $region11: #{processing_layer_forward.1} parent=5 // pred_region
        %s132 = ssub.s32 %s10, 1
        // Predicated region
        $region13: #{processing_layer_forward.1} parent=11 // pred_check
          %p133 = pneg %p69
        $region14: #{processing_layer_forward.1} parent=11 // pred_check_branch
          %135 = sbr.rel (%p133) target = $region16
        $region15: #{processing_layer_forward.1} parent=11 // pred_region
          %137 = vsyncadd [#allocation3], 0
          %s138 = sshll.u32 %s1, 4
          %s139 = int_to_ptr.hbm [resolvable:$true] %s138
          %s140 = sshll.u32 [#allocation2], 4
          %s141 = int_to_ptr.vmem [resolvable:$true] %s140
          %146 = dma.hbm_to_vmem [thread:$0]  %s139, 4096, %s141, [#allocation3], 256, 256, 16
        $region16: #{processing_layer_forward.1} parent=11 // pred_fallthru
          _
        // Predicated region
        $region17: #{processing_layer_forward.1} parent=11 // pred_check
          %p147 = pneg %p90
        $region18: #{processing_layer_forward.1} parent=11 // pred_check_branch
          %149 = sbr.rel (%p147) target = $region20
        $region19: #{processing_layer_forward.1} parent=11 // pred_region
          _
        $region20: #{processing_layer_forward.1} parent=11 // pred_fallthru
          _
      $region12: #{processing_layer_forward.1} parent=5 // pred_fallthru
        _
      %p150 = scmp.lt.s32.totalorder %s10, 2
      // Predicated region
      $region21: #{processing_layer_forward.1} parent=5 // pred_check
        %p151 = pneg %p150
      $region22: #{processing_layer_forward.1} parent=5 // pred_check_branch
        %153 = sbr.rel (%p151) target = $region24
      $region23: #{processing_layer_forward.1} parent=5 // pred_region
        // Predicated region
        $region25: #{processing_layer_forward.1} parent=23 // pred_check
          %p154 = pneg %p42
        $region26: #{processing_layer_forward.1} parent=23 // pred_check_branch
          %156 = sbr.rel (%p154) target = $region28
        $region27: #{processing_layer_forward.1} parent=23 // pred_region
          %p157 = scmp.lt.s32.totalorder %s17, 1
          %s158 = scalar_select %p157, %s17, 1
          %s159 = smul.addr %s158, 3
          %s160 = smul.addr %s159, 8
          %s161 = scalar_lea.vmem %s0, %s160
        $region28: #{processing_layer_forward.1} parent=23 // pred_fallthru
          _
      $region24: #{processing_layer_forward.1} parent=5 // pred_fallthru
        _
      %p162 = scmp.le.s32.totalorder 1, %s10
      %p163 = scmp.lt.s32.totalorder %s10, 3
      %p164 = pnand %p162, %p163
      %p165 = pneg %p164
      // Predicated region
      $region29: #{processing_layer_forward.1} parent=5 // pred_check
        _
      $region30: #{processing_layer_forward.1} parent=5 // pred_check_branch
        %167 = sbr.rel (%p164) target = $region32
      $region31: #{processing_layer_forward.1} parent=5 // pred_region
        %s168 = ssub.s32 %s10, 1
        // Predicated region
        $region33: #{processing_layer_forward.1} parent=31 // pred_check
          %p169 = pneg %p69
        $region34: #{processing_layer_forward.1} parent=31 // pred_check_branch
          %171 = sbr.rel (%p169) target = $region36
        $region35: #{processing_layer_forward.1} parent=31 // pred_region
          %173 = dma.done [#allocation3], 4096
        $region36: #{processing_layer_forward.1} parent=31 // pred_fallthru
          _
        %p174 = scmp.lt.s32.totalorder %s19, 1
        %s175 = scalar_select %p174, %s19, 1
        %s176 = smul.addr %s175, 3
        %s177 = smul.addr %s176, 8
        %s178 = scalar_lea.vmem %s0, %s177
        %p179 = pneg %p48
        %p180 = pneg %p45
        %p181 = pneg %p69
        %p182 = pneg %p66
        %p183 = pneg %p90
        %p184 = pneg %p87
        %p185 = pneg %p118
        %p186 = pneg %p115
        %s187 = smul.u32 2, %s20
        %p188 = scmp.lt.s32.totalorder %s19, 1
        %s189 = scalar_select %p188, %s19, 1
        %p190 = scmp.lt.s32.totalorder %s187, 1
        %s191 = scalar_select %p190, %s187, 1
        %s192 = smul.addr %s189, 2
        %s193 = sadd.s32 %s191, %s192
        %s194 = smul.addr %s193, 8
        %s195 = scalar_lea.vmem %s3, %s194
        %p196 = scmp.lt.s32.totalorder %s19, 1
        %s197 = scalar_select %p196, %s19, 1
        %s198 = smul.addr %s197, 3
        %s199 = smul.addr %s198, 8
        %s200 = scalar_lea.vmem %s0, %s199
        %s201 = smul.u32 2, %s20
        %p202 = scmp.lt.s32.totalorder %s19, 1
        %s203 = scalar_select %p202, %s19, 1
        %p204 = scmp.lt.s32.totalorder %s201, 1
        %s205 = scalar_select %p204, %s201, 1
        %s206 = smul.addr %s203, 2
        %s207 = sadd.s32 %s205, %s206
        %s208 = smul.addr %s207, 8
        %s209 = scalar_lea.vmem %s3, %s208
        %s210 = smul.u32 2, %s20
        %s211 = smul.u32 %s20, 16
        %v212 = vld [vmem:[#allocation2] sm:$0xff]
        %v213 = vld [vmem:[#allocation2 + $0x8] sm:$0xff]
        %v214 = vld [vmem:[#allocation2 + $0x10] sm:$0xff]
        %v215 = vld [vmem:[#allocation2 + $0x18] sm:$0xff]
        %v216 = vld [vmem:[#allocation2 + $0x20] sm:$0xff]
        %v217 = vld [vmem:[#allocation2 + $0x28] sm:$0xff]
        %v218 = vld [vmem:[#allocation2 + $0x30] sm:$0xff]
        %v219 = vld [vmem:[#allocation2 + $0x38] sm:$0xff]
        %v220 = vld [vmem:[#allocation2 + $0x40] sm:$0xff]
        %v221 = vld [vmem:[#allocation2 + $0x48] sm:$0xff]
        %v222 = vld [vmem:[#allocation2 + $0x50] sm:$0xff]
        %v223 = vld [vmem:[#allocation2 + $0x58] sm:$0xff]
        %v224 = vld [vmem:[#allocation2 + $0x60] sm:$0xff]
        %v225 = vld [vmem:[#allocation2 + $0x68] sm:$0xff]
        %v226 = vld [vmem:[#allocation2 + $0x70] sm:$0xff]
        %v227 = vld [vmem:[#allocation2 + $0x78] sm:$0xff]
        %v228 = vld [vmem:[#allocation2 + $0x80] sm:$0xff]
        %v229 = vld [vmem:[#allocation2 + $0x88] sm:$0xff]
        %v230 = vld [vmem:[#allocation2 + $0x90] sm:$0xff]
        %v231 = vld [vmem:[#allocation2 + $0x98] sm:$0xff]
        %v232 = vld [vmem:[#allocation2 + $0xa0] sm:$0xff]
        %v233 = vld [vmem:[#allocation2 + $0xa8] sm:$0xff]
        %v234 = vld [vmem:[#allocation2 + $0xb0] sm:$0xff]
        %v235 = vld [vmem:[#allocation2 + $0xb8] sm:$0xff]
        %v236 = vld [vmem:[#allocation2 + $0xc0] sm:$0xff]
        %v237 = vld [vmem:[#allocation2 + $0xc8] sm:$0xff]
        %v238 = vld [vmem:[#allocation2 + $0xd0] sm:$0xff]
        %v239 = vld [vmem:[#allocation2 + $0xd8] sm:$0xff]
        %v240 = vld [vmem:[#allocation2 + $0xe0] sm:$0xff]
        %v241 = vld [vmem:[#allocation2 + $0xe8] sm:$0xff]
        %v242 = vld [vmem:[#allocation2 + $0xf0] sm:$0xff]
        %v243 = vld [vmem:[#allocation2 + $0xf8] sm:$0xff]
        %s244 = scalar_lea.vmem %s200, %s211
        %v245 = vld [vmem:[%s244] sm:$0xff]
        %v246 = vld [vmem:[%s244 + $0x8] sm:$0xff]
        %s247 = sadd.s32 %s211, 1
        %s248 = scalar_lea.vmem %s200, %s247
        %v249 = vld [vmem:[%s248] sm:$0xff]
        %v250 = vld [vmem:[%s248 + $0x8] sm:$0xff]
        %vm251 = vcmask 523264
        %v253 = vsel %vm251, %v249, 0
        %v256 = vsel %vm251, %v250, 0
        %258 = vmatpush.msra.mxu0 0.0
        %259 = vmatpush.msra.mxu0 0.0
        %260 = vmatpush.msra.mxu0 0.0
        %261 = vmatpush.msra.mxu0 0.0
        %262 = vmatpush.msra.mxu0 0.0
        %263 = vmatpush.msra.mxu0 0.0
        %264 = vmatpush.msra.mxu0 0.0
        %265 = vmatpush.msra.mxu0 0.0
        %266 = vmatpush.msra.mxu0 %v242
        %267 = vmatpush.msra.mxu0 %v240
        %268 = vmatpush.msra.mxu0 %v238
        %269 = vmatpush.msra.mxu0 %v236
        %270 = vmatpush.msra.mxu0 %v234
        %271 = vmatpush.msra.mxu0 %v232
        %272 = vmatpush.msra.mxu0 %v230
        %273 = vmatpush.msra.mxu0 %v228
        %274 = vmatmul.f32.gmra.mxu0 %v253
        %v275 = vpop.f32.mrf.mxu0
        %v276 = vadd.f32 0.0, %v275
        %277 = vmatmul.f32.gmra.mxu0 %v256
        %v278 = vpop.f32.mrf.mxu0
        %v279 = vadd.f32 0.0, %v278
        %280 = vdwg.mxu0
        %281 = vmatpush.msra.mxu0 0.0
        %282 = vmatpush.msra.mxu0 0.0
        %283 = vmatpush.msra.mxu0 0.0
        %284 = vmatpush.msra.mxu0 0.0
        %285 = vmatpush.msra.mxu0 0.0
        %286 = vmatpush.msra.mxu0 0.0
        %287 = vmatpush.msra.mxu0 0.0
        %288 = vmatpush.msra.mxu0 0.0
        %289 = vmatpush.msra.mxu0 %v243
        %290 = vmatpush.msra.mxu0 %v241
        %291 = vmatpush.msra.mxu0 %v239
        %292 = vmatpush.msra.mxu0 %v237
        %293 = vmatpush.msra.mxu0 %v235
        %294 = vmatpush.msra.mxu0 %v233
        %295 = vmatpush.msra.mxu0 %v231
        %296 = vmatpush.msra.mxu0 %v229
        %297 = vmatmul.f32.gmra.mxu0 %v253
        %v298 = vpop.f32.mrf.mxu0
        %v299 = vadd.f32 0.0, %v298
        %300 = vmatmul.f32.gmra.mxu0 %v256
        %v301 = vpop.f32.mrf.mxu0
        %v302 = vadd.f32 0.0, %v301
        %303 = vdwg.mxu0
        %v305 = vsel %vm251, %v245, 0
        %v308 = vsel %vm251, %v246, 0
        %310 = vmatpush.msra.mxu0 0.0
        %311 = vmatpush.msra.mxu0 0.0
        %312 = vmatpush.msra.mxu0 0.0
        %313 = vmatpush.msra.mxu0 0.0
        %314 = vmatpush.msra.mxu0 0.0
        %315 = vmatpush.msra.mxu0 0.0
        %316 = vmatpush.msra.mxu0 0.0
        %317 = vmatpush.msra.mxu0 0.0
        %318 = vmatpush.msra.mxu0 %v226
        %319 = vmatpush.msra.mxu0 %v224
        %320 = vmatpush.msra.mxu0 %v222
        %321 = vmatpush.msra.mxu0 %v220
        %322 = vmatpush.msra.mxu0 %v218
        %323 = vmatpush.msra.mxu0 %v216
        %324 = vmatpush.msra.mxu0 %v214
        %325 = vmatpush.msra.mxu0 %v212
        %326 = vmatmul.f32.gmra.mxu0 %v305
        %v327 = vpop.f32.mrf.mxu0
        %v328 = vadd.f32 %v276, %v327
        %329 = vmatmul.f32.gmra.mxu0 %v308
        %v330 = vpop.f32.mrf.mxu0
        %v331 = vadd.f32 %v279, %v330
        %332 = vdwg.mxu0
        %333 = vmatpush.msra.mxu0 0.0
        %334 = vmatpush.msra.mxu0 0.0
        %335 = vmatpush.msra.mxu0 0.0
        %336 = vmatpush.msra.mxu0 0.0
        %337 = vmatpush.msra.mxu0 0.0
        %338 = vmatpush.msra.mxu0 0.0
        %339 = vmatpush.msra.mxu0 0.0
        %340 = vmatpush.msra.mxu0 0.0
        %341 = vmatpush.msra.mxu0 %v227
        %342 = vmatpush.msra.mxu0 %v225
        %343 = vmatpush.msra.mxu0 %v223
        %344 = vmatpush.msra.mxu0 %v221
        %345 = vmatpush.msra.mxu0 %v219
        %346 = vmatpush.msra.mxu0 %v217
        %347 = vmatpush.msra.mxu0 %v215
        %348 = vmatpush.msra.mxu0 %v213
        %349 = vmatmul.f32.gmra.mxu0 %v305
        %v350 = vpop.f32.mrf.mxu0
        %v351 = vadd.f32 %v299, %v350
        %352 = vmatmul.f32.gmra.mxu0 %v308
        %v353 = vpop.f32.mrf.mxu0
        %v354 = vadd.f32 %v302, %v353
        %355 = vdwg.mxu0
        %v356 = vmul.f32 %v328, %v328
        %v357 = vmul.f32 %v331, %v331
        %v358 = vmul.f32 %v351, %v351
        %v359 = vmul.f32 %v354, %v354
        %v360 = vadd.f32 %v356, %v358
        %v361 = vadd.f32 %v357, %v359
        %v362 = vld [vmem:[%s2] sm:$0xff]
        %v363 = vld [vmem:[%s2 + $0x8] sm:$0xff]
        %v364 = vld [vmem:[%s2 + $0x10] sm:$0xff]
        %v365 = vld [vmem:[%s2 + $0x18] sm:$0xff]
        %v366 = vld [vmem:[%s2 + $0x20] sm:$0xff]
        %v367 = vld [vmem:[%s2 + $0x28] sm:$0xff]
        %v368 = vld [vmem:[%s2 + $0x30] sm:$0xff]
        %v369 = vld [vmem:[%s2 + $0x38] sm:$0xff]
        %v370 = vld [vmem:[%s2 + $0x40] sm:$0xff]
        %v371 = vld [vmem:[%s2 + $0x48] sm:$0xff]
        %v372 = vld [vmem:[%s2 + $0x50] sm:$0xff]
        %v373 = vld [vmem:[%s2 + $0x58] sm:$0xff]
        %v374 = vld [vmem:[%s2 + $0x60] sm:$0xff]
        %v375 = vld [vmem:[%s2 + $0x68] sm:$0xff]
        %v376 = vld [vmem:[%s2 + $0x70] sm:$0xff]
        %v377 = vld [vmem:[%s2 + $0x78] sm:$0xff]
        %378 = vmatpush.msra.mxu0 %v377
        %379 = vmatpush.msra.mxu0 %v376
        %380 = vmatpush.msra.mxu0 %v375
        %381 = vmatpush.msra.mxu0 %v374
        %382 = vmatpush.msra.mxu0 %v373
        %383 = vmatpush.msra.mxu0 %v372
        %384 = vmatpush.msra.mxu0 %v371
        %385 = vmatpush.msra.mxu0 %v370
        %386 = vmatpush.msra.mxu0 %v369
        %387 = vmatpush.msra.mxu0 %v368
        %388 = vmatpush.msra.mxu0 %v367
        %389 = vmatpush.msra.mxu0 %v366
        %390 = vmatpush.msra.mxu0 %v365
        %391 = vmatpush.msra.mxu0 %v364
        %392 = vmatpush.msra.mxu0 %v363
        %393 = vmatpush.msra.mxu0 %v362
        %394 = vmatmul.f32.gmra.mxu0 %v360
        %v395 = vpop.f32.mrf.mxu0
        %v396 = vadd.f32 0.0, %v395
        %397 = vmatmul.f32.gmra.mxu0 %v361
        %v398 = vpop.f32.mrf.mxu0
        %v399 = vadd.f32 0.0, %v398
        %400 = vdwg.mxu0
        %401 = vst [vmem:[%s209] sm:$0xff] %v396
        %402 = vst [vmem:[%s209 + $0x8] sm:$0xff] %v399
        %s403 = smul.u32 2, %s20
        %p404 = scmp.lt.s32.totalorder %s19, 1
        %s405 = scalar_select %p404, %s19, 1
        %p406 = scmp.lt.s32.totalorder %s403, 1
        %s407 = scalar_select %p406, %s403, 1
        %s408 = smul.addr %s405, 2
        %s409 = sadd.s32 %s407, %s408
        %s410 = smul.addr %s409, 8
        %s411 = scalar_lea.vmem %s3, %s410
        // Predicated region
        $region37: #{processing_layer_forward.1} parent=31 // pred_check
          %p412 = pneg %p115
        $region38: #{processing_layer_forward.1} parent=31 // pred_check_branch
          %414 = sbr.rel (%p412) target = $region40
        $region39: #{processing_layer_forward.1} parent=31 // pred_region
          %s415 = smul.u32 2, %s20
        $region40: #{processing_layer_forward.1} parent=31 // pred_fallthru
          _
      $region32: #{processing_layer_forward.1} parent=5 // pred_fallthru
        _
      %p416 = scmp.le.s32.totalorder 2, %s10
      // Predicated region
      $region41: #{processing_layer_forward.1} parent=5 // pred_check
        %p417 = pneg %p416
      $region42: #{processing_layer_forward.1} parent=5 // pred_check_branch
        %419 = sbr.rel (%p417) target = $region44
      $region43: #{processing_layer_forward.1} parent=5 // pred_region
        %s420 = ssub.s32 %s10, 2
        // Predicated region
        $region45: #{processing_layer_forward.1} parent=43 // pred_check
          %p421 = pneg %p121
        $region46: #{processing_layer_forward.1} parent=43 // pred_check_branch
          %423 = sbr.rel (%p421) target = $region48
        $region47: #{processing_layer_forward.1} parent=43 // pred_region
          %s424 = smul.u32 2, %s22
          %p425 = scmp.lt.s32.totalorder %s21, 1
          %s426 = scalar_select %p425, %s21, 1
          %p427 = scmp.lt.s32.totalorder %s424, 1
          %s428 = scalar_select %p427, %s424, 1
          %s429 = smul.addr %s426, 2
          %s430 = sadd.s32 %s428, %s429
          %s431 = smul.addr %s430, 8
          %s432 = scalar_lea.vmem %s3, %s431
        $region48: #{processing_layer_forward.1} parent=43 // pred_fallthru
          _
      $region44: #{processing_layer_forward.1} parent=5 // pred_fallthru
        _
    $region6: #{processing_layer_forward.1} parent=1 // loop_footer
      %s14 = sadd.s32 1, %s10
    $region7: #{processing_layer_forward.1} parent=1 // loop_footer_branch
      %9 = sbr.rel target = $region3
    $region8: #{processing_layer_forward.1} parent=1 // loop_exit
      _
    %433 = vsyncpa [#allocation3], 1
    %s434 = scalar_lea.sflag [#allocation3], 1
    %435 = vsyncpa %s434, 1

</llo_original>
